<compile_context>
chip_gen: v7x
topology: tpu7x:2x2x1
jax: 0.10.0
libtpu: 0.0.40
codegen_flags: <defaults>
</compile_context>

<pallas_src>
import functools
import math

import numpy as np
import jax
import jax.numpy as jnp
from jax.experimental import pallas as pl
from jax.experimental.pallas import tpu as pltpu

# ----------------------------- config (scaled-down UNet2DModel) -----------------------------
SAMPLE = 32                              # sample_size (64 in the original config)
IN_CH = 3
OUT_CH = 3
BLOCK_OUT = (16, 32, 32, 64, 64, 128)    # (128, 256, 256, 512, 512, 1024) / 8
LAYERS_PER_BLOCK = 2
DOWN_TYPES = ("Down", "Down", "Down", "Down", "AttnDown", "AttnDown")
UP_TYPES = ("AttnUp", "AttnUp", "Up", "Up", "Up", "Up")
NUM_CLASS = 24
TIME_EMBED_DIM = BLOCK_OUT[0] * 4        # == embed_size of the class-embedding Linear
NORM_GROUPS = 8                          # norm_num_groups (32 in the original config)
HEAD_DIM = 8                             # attention_head_dim (diffusers default)
GN_EPS = 1e-5


# ----------------------------- small in-kernel helpers -----------------------------
def _one_hot_fold(n, groups):
    """(n, groups) / (groups, n) one-hot fold/unfold matrices built from iota."""
    per = n // groups
    c0 = jax.lax.broadcasted_iota(jnp.int32, (n, groups), 0)
    g0 = jax.lax.broadcasted_iota(jnp.int32, (n, groups), 1)
    fold = (c0 // per == g0).astype(jnp.float32)          # (n, groups)
    g1 = jax.lax.broadcasted_iota(jnp.int32, (groups, n), 0)
    c1 = jax.lax.broadcasted_iota(jnp.int32, (groups, n), 1)
    unfold = (c1 // per == g1).astype(jnp.float32)        # (groups, n)
    return fold, unfold


def _gn_scale_shift(s1, s2, count, groups, eps):
    """Per-channel mean / rstd (shape (1, C)) from per-channel sum / sum-of-squares."""
    fold, unfold = _one_hot_fold(s1.shape[-1], groups)
    mean = jnp.dot(s1, fold, preferred_element_type=jnp.float32) / count      # (1, G)
    var = jnp.dot(s2, fold, preferred_element_type=jnp.float32) / count - mean * mean
    rstd = jax.lax.rsqrt(var + eps)
    mean_c = jnp.dot(mean, unfold, preferred_element_type=jnp.float32)        # (1, C)
    rstd_c = jnp.dot(rstd, unfold, preferred_element_type=jnp.float32)        # (1, C)
    return mean_c, rstd_c


# ----------------------------- fused 3x3 conv kernel -----------------------------
def _conv3x3_kernel(*refs, H, W, C, Cout, groups, pre_gn, add_temb, add_res, eps):
    it = iter(refs)
    x_ref = next(it)                       # (H, W, C)        f32 (batch squeezed by BlockSpec)
    w_ref = next(it)                       # (3, 3, C, Cout)  bf16
    b_ref = next(it)                       # (1, Cout)        f32
    if pre_gn:
        g_ref = next(it)                   # (1, C)
        beta_ref = next(it)                # (1, C)
    if add_temb:
        te_ref = next(it)                  # (B, TIME_EMBED_DIM)
        tw_ref = next(it)                  # (TIME_EMBED_DIM, Cout)
        tb_ref = next(it)                  # (1, Cout)
    if add_res:
        r_ref = next(it)                   # (H*W, Cout)
    o_ref = next(it)                       # (H*W, Cout)
    xs_ref = next(it)                      # scratch (H+2, W+2, C) f32

    x = x_ref[...]
    if pre_gn:
        # GroupNorm statistics in f32 over (H, W, C/groups) per group, then fused SiLU.
        s1 = jnp.sum(jnp.sum(x, axis=0), axis=0, keepdims=True)        # (1, C)
        s2 = jnp.sum(jnp.sum(x * x, axis=0), axis=0, keepdims=True)    # (1, C)
        cnt = float(H * W * (C // groups))
        mean_c, rstd_c = _gn_scale_shift(s1, s2, cnt, groups, eps)
        y = (x - mean_c) * rstd_c * g_ref[...] + beta_ref[...]
        y = y * jax.nn.sigmoid(y)                                      # SiLU
    else:
        y = x

    # Zero-padded VMEM staging tile handles the conv halo (no HBM pad / im2col).
    xs_ref[...] = jnp.zeros((H + 2, W + 2, C), jnp.float32)
    xs_ref[1:H + 1, 1:W + 1, :] = y

    extra = b_ref[...]                                                 # (1, Cout)
    if add_temb:
        tin = te_ref[pl.ds(pl.program_id(0), 1), :]                    # (1, TEMB) for this batch
        extra = extra + jnp.dot(tin, tw_ref[...],
                                preferred_element_type=jnp.float32) + tb_ref[...]

    if W % 8 == 0:
        # In-VMEM im2col: 9 shifted bf16 dots accumulated into one f32 accumulator.
        acc = jnp.zeros((H * W, Cout), jnp.float32)
        for ky in range(3):
            for kx in range(3):
                patch = xs_ref[ky:ky + H, kx:kx + W, :].reshape(H * W, C)
                acc = acc + jnp.dot(patch.astype(jnp.bfloat16), w_ref[ky, kx],
                                    preferred_element_type=jnp.float32)
        out = acc + extra
        if add_res:
            out = out + r_ref[...]
        o_ref[...] = out
    else:
        # Tiny spatial sizes (4/2/1): per-output-row accumulation, no reshapes needed.
        for h in range(H):
            acc = jnp.zeros((W, Cout), jnp.float32)
            for ky in range(3):
                for kx in range(3):
                    row = xs_ref[h + ky, kx:kx + W, :]                 # (W, C)
                    acc = acc + jnp.dot(row.astype(jnp.bfloat16), w_ref[ky, kx],
                                        preferred_element_type=jnp.float32)
            out = acc + extra
            if add_res:
                out = out + r_ref[h * W:(h + 1) * W, :]
            o_ref[h * W:(h + 1) * W, :] = out


@functools.lru_cache(maxsize=None)
def _build_conv3x3(B, H, W, C, Cout, pre_gn, add_temb, add_res):
    in_specs = [
        pl.BlockSpec((None, H, W, C), lambda i: (i, 0, 0, 0)),
        pl.BlockSpec((3, 3, C, Cout), lambda i: (0, 0, 0, 0)),
        pl.BlockSpec((1, Cout), lambda i: (0, 0)),
    ]
    if pre_gn:
        in_specs += [pl.BlockSpec((1, C), lambda i: (0, 0)),
                     pl.BlockSpec((1, C), lambda i: (0, 0))]
    if add_temb:
        in_specs += [pl.BlockSpec((B, TIME_EMBED_DIM), lambda i: (0, 0)),
                     pl.BlockSpec((TIME_EMBED_DIM, Cout), lambda i: (0, 0)),
                     pl.BlockSpec((1, Cout), lambda i: (0, 0))]
    if add_res:
        in_specs += [pl.BlockSpec((None, H * W, Cout), lambda i: (i, 0, 0))]
    kernel = functools.partial(_conv3x3_kernel, H=H, W=W, C=C, Cout=Cout,
                               groups=NORM_GROUPS, pre_gn=pre_gn,
                               add_temb=add_temb, add_res=add_res, eps=GN_EPS)
    call = pl.pallas_call(
        kernel,
        out_shape=jax.ShapeDtypeStruct((B, H * W, Cout), jnp.float32),
        grid_spec=pltpu.PrefetchScalarGridSpec(
            num_scalar_prefetch=0,
            grid=(B,),
            in_specs=in_specs,
            out_specs=pl.BlockSpec((None, H * W, Cout), lambda i: (i, 0, 0)),
            scratch_shapes=[pltpu.VMEM((H + 2, W + 2, C), jnp.float32)]),
        compiler_params=pltpu.CompilerParams(dimension_semantics=("parallel",)),
    )
    return jax.jit(call)


def conv3x3(x, p, gn=None, temb=None, residual=None, stride=1):
    """3x3 conv (pad=1) with optional fused GN+SiLU prologue, temb add and residual add."""
    b, h, w, c = x.shape
    cout = p["w"].shape[-1]
    pre_gn, add_temb, add_res = gn is not None, temb is not None, residual is not None
    inputs = [x, p["w"].astype(jnp.bfloat16), p["b"].reshape(1, cout)]
    if pre_gn:
        inputs += [gn["g"].reshape(1, c), gn["b"].reshape(1, c)]
    if add_temb:
        temb_act, tp = temb
        inputs += [temb_act, tp["w"], tp["b"].reshape(1, cout)]
    if add_res:
        inputs += [residual.reshape(b, h * w, cout)]
    out = _build_conv3x3(b, h, w, c, cout, pre_gn, add_temb, add_res)(*inputs)
    out = out.reshape(b, h, w, cout)
    if stride == 2:
        # stride-2 conv == stride-1 conv subsampled at even output positions
        out = out[:, ::2, ::2, :]
    return out


# ----------------------------- generic matmul (1x1 shortcut convs) -----------------------------
def _matmul_kernel(x_ref, w_ref, b_ref, o_ref):
    acc = jnp.dot(x_ref[...].astype(jnp.bfloat16), w_ref[...].astype(jnp.bfloat16),
                  preferred_element_type=jnp.float32)
    o_ref[...] = acc + b_ref[...]


@functools.lru_cache(maxsize=None)
def _build_matmul(mp, k, n, tm):
    call = pl.pallas_call(
        _matmul_kernel,
        out_shape=jax.ShapeDtypeStruct((mp, n), jnp.float32),
        grid_spec=pltpu.PrefetchScalarGridSpec(
            num_scalar_prefetch=0,
            grid=(mp // tm,),
            in_specs=[pl.BlockSpec((tm, k), lambda i: (i, 0)),
                      pl.BlockSpec((k, n), lambda i: (0, 0)),
                      pl.BlockSpec((1, n), lambda i: (0, 0))],
            out_specs=pl.BlockSpec((tm, n), lambda i: (i, 0))),
        compiler_params=pltpu.CompilerParams(dimension_semantics=("parallel",)),
    )
    return jax.jit(call)


def pallas_linear(x, w, b):
    m, k = x.shape
    n = w.shape[1]
    tile = 512
    if m <= tile:
        mp = max(8, -(-m // 8) * 8)
        tm = mp
    else:
        mp = -(-m // tile) * tile
        tm = tile
    xp = x if mp == m else jnp.pad(x, ((0, mp - m), (0, 0)))
    out = _build_matmul(mp, k, n, tm)(xp, w, b.reshape(1, n))
    return out if mp == m else out[:m]


def conv1x1(x, p):
    b, h, w, c = x.shape
    cout = p["w"].shape[-1]
    out = pallas_linear(x.reshape(b * h * w, c), p["w"].reshape(c, cout), p["b"])
    return out.reshape(b, h, w, cout)


# ----------------------------- fused attention block kernel -----------------------------
def _attn_block_kernel(x_ref, g_ref, bt_ref, wqkv_ref, bqkv_ref, wo_ref, bo_ref, o_ref,
                       *, S, C, groups, heads, eps):
    x = x_ref[...]                                       # (S, C) f32, one batch per grid step
    # --- GroupNorm (f32 stats) ---
    s1 = jnp.sum(x, axis=0, keepdims=True)
    s2 = jnp.sum(x * x, axis=0, keepdims=True)
    mean_c, rstd_c = _gn_scale_shift(s1, s2, float(S * (C // groups)), groups, eps)
    xn = (x - mean_c) * rstd_c * g_ref[...] + bt_ref[...]

    # --- fused QKV projection (lane-dense (S, 3C) output) ---
    qkv = jnp.dot(xn, wqkv_ref[...], preferred_element_type=jnp.float32) + bqkv_ref[...]
    q = qkv[:, :C]
    k = qkv[:, C:2 * C]
    v = qkv[:, 2 * C:]

    # --- per-head attention via channel<->head one-hot matmuls (no head transposes) ---
    fold, unfold = _one_hot_fold(C, heads)               # (C, heads), (heads, C)
    scale = 1.0 / math.sqrt(C // heads)
    rows = []
    for i in range(S):
        qi = q[i:i + 1, :]                                                   # (1, C)
        sc = jnp.dot(qi * k, fold, preferred_element_type=jnp.float32) * scale   # (S, heads)
        m = jnp.max(sc, axis=0, keepdims=True)
        p = jnp.exp(sc - m)
        p = p / jnp.sum(p, axis=0, keepdims=True)
        pc = jnp.dot(p, unfold, preferred_element_type=jnp.float32)          # (S, C)
        rows.append(jnp.sum(pc * v, axis=0, keepdims=True))                  # (1, C)
    attn = rows[0] if S == 1 else jnp.concatenate(rows, axis=0)              # (S, C)

    # --- output projection + residual ---
    out = jnp.dot(attn, wo_ref[...], preferred_element_type=jnp.float32) + bo_ref[...]
    o_ref[...] = out + x


@functools.lru_cache(maxsize=None)
def _build_attention(B, S, C):
    heads = C // HEAD_DIM
    kernel = functools.partial(_attn_block_kernel, S=S, C=C, groups=NORM_GROUPS,
                               heads=heads, eps=GN_EPS)
    call = pl.pallas_call(
        kernel,
        out_shape=jax.ShapeDtypeStruct((B, S, C), jnp.float32),
        grid_spec=pltpu.PrefetchScalarGridSpec(
            num_scalar_prefetch=0,
            grid=(B,),
            in_specs=[pl.BlockSpec((None, S, C), lambda i: (i, 0, 0)),
                      pl.BlockSpec((1, C), lambda i: (0, 0)),
                      pl.BlockSpec((1, C), lambda i: (0, 0)),
                      pl.BlockSpec((C, 3 * C), lambda i: (0, 0)),
                      pl.BlockSpec((1, 3 * C), lambda i: (0, 0)),
                      pl.BlockSpec((C, C), lambda i: (0, 0)),
                      pl.BlockSpec((1, C), lambda i: (0, 0))],
            out_specs=pl.BlockSpec((None, S, C), lambda i: (i, 0, 0))),
        compiler_params=pltpu.CompilerParams(dimension_semantics=("parallel",)),
    )
    return jax.jit(call)


def attention_block(x, p):
    """diffusers Attention (spatial, residual_connection=True, bias=True) — one fused kernel."""
    b, h, w, c = x.shape
    s = h * w
    out = _build_attention(b, s, c)(
        x.reshape(b, s, c),
        p["norm"]["g"].reshape(1, c), p["norm"]["b"].reshape(1, c),
        p["qkv"]["w"], p["qkv"]["b"].reshape(1, 3 * c),
        p["to_out"]["w"], p["to_out"]["b"].reshape(1, c))
    return out.reshape(b, h, w, c)


# ----------------------------- fused time / class embedding kernel -----------------------------
def _time_embed_kernel(t_ref, y_ref, w1_ref, b1_ref, w2_ref, b2_ref, wc_ref, bc_ref, o_ref):
    e = jnp.dot(t_ref[...], w1_ref[...], preferred_element_type=jnp.float32) + b1_ref[...]
    e = e * jax.nn.sigmoid(e)                                           # SiLU
    e = jnp.dot(e, w2_ref[...], preferred_element_type=jnp.float32) + b2_ref[...]
    e = e + jnp.dot(y_ref[...], wc_ref[...], preferred_element_type=jnp.float32) + bc_ref[...]
    o_ref[...] = e * jax.nn.sigmoid(e)                                  # SiLU applied by resnets


@functools.lru_cache(maxsize=None)
def _build_time_embed(B, tdim, ydim, edim):
    call = pl.pallas_call(
        _time_embed_kernel,
        out_shape=jax.ShapeDtypeStruct((B, edim), jnp.float32),
        grid_spec=pltpu.PrefetchScalarGridSpec(
            num_scalar_prefetch=0, grid=(1,),
            in_specs=[pl.BlockSpec((B, tdim), lambda i: (0, 0)),
                      pl.BlockSpec((B, ydim), lambda i: (0, 0)),
                      pl.BlockSpec((tdim, edim), lambda i: (0, 0)),
                      pl.BlockSpec((1, edim), lambda i: (0, 0)),
                      pl.BlockSpec((edim, edim), lambda i: (0, 0)),
                      pl.BlockSpec((1, edim), lambda i: (0, 0)),
                      pl.BlockSpec((ydim, edim), lambda i: (0, 0)),
                      pl.BlockSpec((1, edim), lambda i: (0, 0))],
            out_specs=pl.BlockSpec((B, edim), lambda i: (0, 0))),
    )
    return jax.jit(call)


def fused_time_embed(temb, y, params):
    b = temb.shape[0]
    e = TIME_EMBED_DIM
    tm = params["time_mlp"]
    ce = params["class_emb"]
    return _build_time_embed(b, temb.shape[1], y.shape[1], e)(
        temb, y,
        tm["lin1"]["w"], tm["lin1"]["b"].reshape(1, e),
        tm["lin2"]["w"], tm["lin2"]["b"].reshape(1, e),
        ce["w"], ce["b"].reshape(1, e))


# ----------------------------- blocks (thin wrappers) -----------------------------
def resnet_block(x, temb_act, p):
    """diffusers ResnetBlock2D, as two fused conv kernels (+ optional 1x1 shortcut matmul)."""
    h = conv3x3(x, p["conv1"], gn=p["norm1"], temb=(temb_act, p["time_proj"]))
    sc = conv1x1(x, p["shortcut"]) if "shortcut" in p else x
    return conv3x3(h, p["conv2"], gn=p["norm2"], residual=sc)


def upsample(x, p):
    # TODO(synk): the 2x nearest-neighbour expand could be folded into the conv kernel's input
    #             indexing instead of materializing the upsampled activation (small at this size).
    x = jnp.repeat(jnp.repeat(x, 2, axis=1), 2, axis=2)
    return conv3x3(x, p)


def timestep_embedding(t, dim):
    """diffusers get_timestep_embedding with flip_sin_to_cos=True, freq_shift=0 -> [cos, sin]."""
    half = dim // 2
    freqs = jnp.exp(-math.log(10000.0) * jnp.arange(half, dtype=jnp.float32) / half)
    args = t.astype(jnp.float32)[:, None] * freqs[None, :]
    emb = jnp.concatenate([jnp.sin(args), jnp.cos(args)], axis=-1)
    return jnp.concatenate([emb[:, half:], emb[:, :half]], axis=-1)


# ----------------------------- deterministic synthetic parameters -----------------------------
class ParamGen:
    def __init__(self, seed=0):
        self._key = jax.random.PRNGKey(seed)

    def next(self):
        self._key, k = jax.random.split(self._key)
        return k


def linear_params(pg, fan_in, fan_out):
    return {"w": jax.random.normal(pg.next(), (fan_in, fan_out), jnp.float32) / np.sqrt(fan_in),
            "b": 0.01 * jax.random.normal(pg.next(), (fan_out,), jnp.float32)}


def conv_params(pg, cin, cout, k=3):
    return {"w": jax.random.normal(pg.next(), (k, k, cin, cout), jnp.float32) / np.sqrt(cin * k * k),
            "b": 0.01 * jax.random.normal(pg.next(), (cout,), jnp.float32)}


def gn_params(pg, c):
    return {"g": 1.0 + 0.05 * jax.random.normal(pg.next(), (c,), jnp.float32),
            "b": 0.05 * jax.random.normal(pg.next(), (c,), jnp.float32)}


def resnet_params(pg, cin, cout, temb_dim):
    p = {"norm1": gn_params(pg, cin),
         "conv1": conv_params(pg, cin, cout),
         "time_proj": linear_params(pg, temb_dim, cout),
         "norm2": gn_params(pg, cout),
         "conv2": conv_params(pg, cout, cout)}
    if cin != cout:
        p["shortcut"] = conv_params(pg, cin, cout, k=1)
    return p


def attn_params(pg, c):
    # q/k/v projections are stored pre-fused along the output axis (equivalent to 3 Linears).
    return {"norm": gn_params(pg, c),
            "qkv": linear_params(pg, c, 3 * c),
            "to_out": linear_params(pg, c, c)}


def build_params(seed=0):
    pg = ParamGen(seed)
    params = {"conv_in": conv_params(pg, IN_CH, BLOCK_OUT[0]),
              "time_mlp": {"lin1": linear_params(pg, BLOCK_OUT[0], TIME_EMBED_DIM),
                           "lin2": linear_params(pg, TIME_EMBED_DIM, TIME_EMBED_DIM)},
              # the explicitly replaced module: self.model.class_embedding = nn.Linear(num_class, embed_size)
              "class_emb": linear_params(pg, NUM_CLASS, TIME_EMBED_DIM)}

    down = []
    out_ch = BLOCK_OUT[0]
    for i, btype in enumerate(DOWN_TYPES):
        in_ch, out_ch = out_ch, BLOCK_OUT[i]
        is_final = i == len(DOWN_TYPES) - 1
        resnets, attns = [], []
        for j in range(LAYERS_PER_BLOCK):
            rin = in_ch if j == 0 else out_ch
            resnets.append(resnet_params(pg, rin, out_ch, TIME_EMBED_DIM))
            if btype == "AttnDown":
                attns.append(attn_params(pg, out_ch))
        blk = {"resnets": resnets, "attns": attns}
        if not is_final:
            blk["down"] = conv_params(pg, out_ch, out_ch)
        down.append(blk)
    params["down"] = down

    mid_ch = BLOCK_OUT[-1]
    params["mid"] = {"resnet1": resnet_params(pg, mid_ch, mid_ch, TIME_EMBED_DIM),
                     "attn": attn_params(pg, mid_ch),
                     "resnet2": resnet_params(pg, mid_ch, mid_ch, TIME_EMBED_DIM)}

    up = []
    rev = list(reversed(BLOCK_OUT))
    out_ch = rev[0]
    for i, btype in enumerate(UP_TYPES):
        prev_out, out_ch = out_ch, rev[i]
        in_ch = rev[min(i + 1, len(BLOCK_OUT) - 1)]
        is_final = i == len(UP_TYPES) - 1
        resnets, attns = [], []
        for j in range(LAYERS_PER_BLOCK + 1):
            res_skip = in_ch if j == LAYERS_PER_BLOCK else out_ch
            rin = prev_out if j == 0 else out_ch
            resnets.append(resnet_params(pg, rin + res_skip, out_ch, TIME_EMBED_DIM))
            if btype == "AttnUp":
                attns.append(attn_params(pg, out_ch))
        blk = {"resnets": resnets, "attns": attns}
        if not is_final:
            blk["up"] = conv_params(pg, out_ch, out_ch)
        up.append(blk)
    params["up"] = up

    params["norm_out"] = gn_params(pg, BLOCK_OUT[0])
    params["conv_out"] = conv_params(pg, BLOCK_OUT[0], OUT_CH)
    return params


# ----------------------------- full forward (NoisePredictor.forward) -----------------------------
def noise_predictor_forward(params, x_nchw, t, y):
    x = jnp.transpose(x_nchw, (0, 2, 3, 1))                     # NCHW -> NHWC

    # time + class embedding (single fused kernel); resnets consume SiLU(emb)
    temb = timestep_embedding(t, BLOCK_OUT[0])
    temb_act = fused_time_embed(temb, y, params)

    # conv_in
    h = conv3x3(x, params["conv_in"])
    skips = [h]

    # down path
    for blk, btype in zip(params["down"], DOWN_TYPES):
        for j, rp in enumerate(blk["resnets"]):
            h = resnet_block(h, temb_act, rp)
            if btype == "AttnDown":
                h = attention_block(h, blk["attns"][j])
            skips.append(h)
        if "down" in blk:
            h = conv3x3(h, blk["down"], stride=2)
            skips.append(h)

    # mid block
    h = resnet_block(h, temb_act, params["mid"]["resnet1"])
    h = attention_block(h, params["mid"]["attn"])
    h = resnet_block(h, temb_act, params["mid"]["resnet2"])

    # up path (skip-connection concat on channel axis)
    for blk, btype in zip(params["up"], UP_TYPES):
        for j, rp in enumerate(blk["resnets"]):
            skip = skips.pop()
            h = jnp.concatenate([h, skip], axis=-1)
            h = resnet_block(h, temb_act, rp)
            if btype == "AttnUp":
                h = attention_block(h, blk["attns"][j])
        if "up" in blk:
            h = upsample(h, blk["up"])

    # post-process: GN + SiLU fused into conv_out
    h = conv3x3(h, params["conv_out"], gn=params["norm_out"])
    return jnp.transpose(h, (0, 3, 1, 2))                       # NHWC -> NCHW (matches .sample)


if __name__ == "__main__":
    key = jax.random.PRNGKey(0)
    kx, kt, ky = jax.random.split(key, 3)
    B = 2
    x = jax.random.normal(kx, (B, IN_CH, SAMPLE, SAMPLE), jnp.float32)            # NCHW like PyTorch
    t = jax.random.randint(kt, (B,), 0, 1000).astype(jnp.float32)                 # timesteps
    y = jax.nn.one_hot(jax.random.randint(ky, (B,), 0, NUM_CLASS), NUM_CLASS,     # class labels (B, 24)
                       dtype=jnp.float32)

    params = build_params(seed=0)
    out = noise_predictor_forward(params, x, t, y)
    out = jax.block_until_ready(out)
    assert out.shape == (B, OUT_CH, SAMPLE, SAMPLE), out.shape
    assert bool(jnp.all(jnp.isfinite(out)))
    print("KERNEL_OK")
</pallas_src>

<mosaic_0001>
module attributes {stable_mosaic.version = 11 : i64} {
  func.func @_time_embed_kernel(%arg0: i32, %arg1: memref<2x16xf32, #tpu.memory_space<vmem>>, %arg2: memref<2x24xf32, #tpu.memory_space<vmem>>, %arg3: memref<16x64xf32, #tpu.memory_space<vmem>>, %arg4: memref<1x64xf32, #tpu.memory_space<vmem>>, %arg5: memref<64x64xf32, #tpu.memory_space<vmem>>, %arg6: memref<1x64xf32, #tpu.memory_space<vmem>>, %arg7: memref<24x64xf32, #tpu.memory_space<vmem>>, %arg8: memref<1x64xf32, #tpu.memory_space<vmem>>, %arg9: memref<2x64xf32, #tpu.memory_space<vmem>>) attributes {dimension_semantics = [#tpu.dimension_semantics<arbitrary>], iteration_bounds = array<i64: 1>, scalar_prefetch = 0 : i64, scratch_operands = 0 : i64, tpu.core_type = #tpu.core_type<tc>, window_params = [{pipeline_mode = #tpu.pipeline_mode<synchronous>, transform_indices = @transform_0, window_bounds = array<i64: 2, 16>}, {pipeline_mode = #tpu.pipeline_mode<synchronous>, transform_indices = @transform_1, window_bounds = array<i64: 2, 24>}, {pipeline_mode = #tpu.pipeline_mode<synchronous>, transform_indices = @transform_2, window_bounds = array<i64: 16, 64>}, {pipeline_mode = #tpu.pipeline_mode<synchronous>, transform_indices = @transform_3, window_bounds = array<i64: 1, 64>}, {pipeline_mode = #tpu.pipeline_mode<synchronous>, transform_indices = @transform_4, window_bounds = array<i64: 64, 64>}, {pipeline_mode = #tpu.pipeline_mode<synchronous>, transform_indices = @transform_5, window_bounds = array<i64: 1, 64>}, {pipeline_mode = #tpu.pipeline_mode<synchronous>, transform_indices = @transform_6, window_bounds = array<i64: 24, 64>}, {pipeline_mode = #tpu.pipeline_mode<synchronous>, transform_indices = @transform_7, window_bounds = array<i64: 1, 64>}, {pipeline_mode = #tpu.pipeline_mode<synchronous>, transform_indices = @transform_8, window_bounds = array<i64: 2, 64>}]} {
    %c0 = arith.constant 0 : index
    %c0_0 = arith.constant 0 : index
    %0 = vector.load %arg1[%c0, %c0_0] : memref<2x16xf32, #tpu.memory_space<vmem>>, vector<2x16xf32>
    %c0_1 = arith.constant 0 : index
    %c0_2 = arith.constant 0 : index
    %1 = vector.load %arg3[%c0_1, %c0_2] : memref<16x64xf32, #tpu.memory_space<vmem>>, vector<16x64xf32>
    %cst = arith.constant dense<0.000000e+00> : vector<2x64xf32>
    %2 = tpu.matmul %0, %1, %cst {dimension_numbers = #tpu.dot_dimension_numbers<[1], [0], [0], [1], [0, 0, 1, 1], [], []>} : vector<2x16xf32>, vector<16x64xf32>, vector<2x64xf32> -> vector<2x64xf32>
    %c0_3 = arith.constant 0 : index
    %c0_4 = arith.constant 0 : index
    %3 = vector.load %arg4[%c0_3, %c0_4] : memref<1x64xf32, #tpu.memory_space<vmem>>, vector<1x64xf32>
    %4 = vector.broadcast %3 : vector<1x64xf32> to vector<2x64xf32>
    %5 = arith.addf %2, %4 : vector<2x64xf32>
    %6 = arith.negf %5 : vector<2x64xf32>
    %7 = math.exp %6 : vector<2x64xf32>
    %cst_5 = arith.constant 1.000000e+00 : f32
    %8 = vector.broadcast %cst_5 : f32 to vector<2x64xf32>
    %9 = arith.addf %8, %7 : vector<2x64xf32>
    %10 = arith.divf %8, %9 : vector<2x64xf32>
    %11 = arith.mulf %5, %10 : vector<2x64xf32>
    %c0_6 = arith.constant 0 : index
    %c0_7 = arith.constant 0 : index
    %12 = vector.load %arg5[%c0_6, %c0_7] : memref<64x64xf32, #tpu.memory_space<vmem>>, vector<64x64xf32>
    %cst_8 = arith.constant dense<0.000000e+00> : vector<2x64xf32>
    %13 = tpu.matmul %11, %12, %cst_8 {dimension_numbers = #tpu.dot_dimension_numbers<[1], [0], [0], [1], [0, 0, 1, 1], [], []>} : vector<2x64xf32>, vector<64x64xf32>, vector<2x64xf32> -> vector<2x64xf32>
    %c0_9 = arith.constant 0 : index
    %c0_10 = arith.constant 0 : index
    %14 = vector.load %arg6[%c0_9, %c0_10] : memref<1x64xf32, #tpu.memory_space<vmem>>, vector<1x64xf32>
    %15 = vector.broadcast %14 : vector<1x64xf32> to vector<2x64xf32>
    %16 = arith.addf %13, %15 : vector<2x64xf32>
    %c0_11 = arith.constant 0 : index
    %c0_12 = arith.constant 0 : index
    %17 = vector.load %arg2[%c0_11, %c0_12] : memref<2x24xf32, #tpu.memory_space<vmem>>, vector<2x24xf32>
    %c0_13 = arith.constant 0 : index
    %c0_14 = arith.constant 0 : index
    %18 = vector.load %arg7[%c0_13, %c0_14] : memref<24x64xf32, #tpu.memory_space<vmem>>, vector<24x64xf32>
    %cst_15 = arith.constant dense<0.000000e+00> : vector<2x64xf32>
    %19 = tpu.matmul %17, %18, %cst_15 {dimension_numbers = #tpu.dot_dimension_numbers<[1], [0], [0], [1], [0, 0, 1, 1], [], []>} : vector<2x24xf32>, vector<24x64xf32>, vector<2x64xf32> -> vector<2x64xf32>
    %20 = arith.addf %16, %19 : vector<2x64xf32>
    %c0_16 = arith.constant 0 : index
    %c0_17 = arith.constant 0 : index
    %21 = vector.load %arg8[%c0_16, %c0_17] : memref<1x64xf32, #tpu.memory_space<vmem>>, vector<1x64xf32>
    %22 = vector.broadcast %21 : vector<1x64xf32> to vector<2x64xf32>
    %23 = arith.addf %20, %22 : vector<2x64xf32>
    %24 = arith.negf %23 : vector<2x64xf32>
    %25 = math.exp %24 : vector<2x64xf32>
    %cst_18 = arith.constant 1.000000e+00 : f32
    %26 = vector.broadcast %cst_18 : f32 to vector<2x64xf32>
    %27 = arith.addf %26, %25 : vector<2x64xf32>
    %28 = arith.divf %26, %27 : vector<2x64xf32>
    %29 = arith.mulf %23, %28 : vector<2x64xf32>
    %c0_19 = arith.constant 0 : index
    %c0_20 = arith.constant 0 : index
    %30 = vector.load %arg9[%c0_19, %c0_20] : memref<2x64xf32, #tpu.memory_space<vmem>>, vector<2x64xf32>
    tpu.vector_store %arg9[%c0_19, %c0_20], %29 {strides = array<i32>} : memref<2x64xf32, #tpu.memory_space<vmem>>, vector<2x64xf32>,
    return
  }
  func.func @transform_0(%arg0: i32) -> (i32, i32) {
    %c0_i32 = arith.constant 0 : i32
    %c0_i32_0 = arith.constant 0 : i32
    %c0_i32_1 = arith.constant 0 : i32
    return %c0_i32, %c0_i32_0 : i32, i32
  }
  func.func @transform_1(%arg0: i32) -> (i32, i32) {
    %c0_i32 = arith.constant 0 : i32
    %c0_i32_0 = arith.constant 0 : i32
    %c0_i32_1 = arith.constant 0 : i32
    return %c0_i32, %c0_i32_0 : i32, i32
  }
  func.func @transform_2(%arg0: i32) -> (i32, i32) {
    %c0_i32 = arith.constant 0 : i32
    %c0_i32_0 = arith.constant 0 : i32
    %c0_i32_1 = arith.constant 0 : i32
    return %c0_i32, %c0_i32_0 : i32, i32
  }
  func.func @transform_3(%arg0: i32) -> (i32, i32) {
    %c0_i32 = arith.constant 0 : i32
    %c0_i32_0 = arith.constant 0 : i32
    %c0_i32_1 = arith.constant 0 : i32
    return %c0_i32, %c0_i32_0 : i32, i32
  }
  func.func @transform_4(%arg0: i32) -> (i32, i32) {
    %c0_i32 = arith.constant 0 : i32
    %c0_i32_0 = arith.constant 0 : i32
    %c0_i32_1 = arith.constant 0 : i32
    return %c0_i32, %c0_i32_0 : i32, i32
  }
  func.func @transform_5(%arg0: i32) -> (i32, i32) {
    %c0_i32 = arith.constant 0 : i32
    %c0_i32_0 = arith.constant 0 : i32
    %c0_i32_1 = arith.constant 0 : i32
    return %c0_i32, %c0_i32_0 : i32, i32
  }
  func.func @transform_6(%arg0: i32) -> (i32, i32) {
    %c0_i32 = arith.constant 0 : i32
    %c0_i32_0 = arith.constant 0 : i32
    %c0_i32_1 = arith.constant 0 : i32
    return %c0_i32, %c0_i32_0 : i32, i32
  }
  func.func @transform_7(%arg0: i32) -> (i32, i32) {
    %c0_i32 = arith.constant 0 : i32
    %c0_i32_0 = arith.constant 0 : i32
    %c0_i32_1 = arith.constant 0 : i32
    return %c0_i32, %c0_i32_0 : i32, i32
  }
  func.func @transform_8(%arg0: i32) -> (i32, i32) {
    %c0_i32 = arith.constant 0 : i32
    %c0_i32_0 = arith.constant 0 : i32
    %c0_i32_1 = arith.constant 0 : i32
    return %c0_i32, %c0_i32_0 : i32, i32
  }
}

</mosaic_0001>

<llo_original>
// kernel: tpu_custom_call.1
$region0: #{tpu_custom_call.1}
  #allocation0 [shape = 'u32[]', space=smem, size = 0x4, offset = 0x4, fixed_abs, tag = 'smem constant byte address 0x4 - core index']
  #allocation1 [shape = 'u32[144,128]{1,0:T(1,128)}', space=vmem, size = 0x12000, scoped, tag = 'internal scratch']
  %s0 = inlined_call_operand.hbm [shape: f32[2,16], index: 0, kind: input, shape index: {}]
  %s1 = inlined_call_operand.vmem [shape: f32[2,24], index: 1, kind: input, shape index: {}]
  %s2 = inlined_call_operand.hbm [shape: f32[16,64], index: 2, kind: input, shape index: {}]
  %s3 = inlined_call_operand.vmem [shape: f32[1,64], index: 3, kind: input, shape index: {}]
  %s4 = inlined_call_operand.hbm [shape: f32[64,64], index: 4, kind: input, shape index: {}]
  %s5 = inlined_call_operand.vmem [shape: f32[1,64], index: 5, kind: input, shape index: {}]
  %s6 = inlined_call_operand.hbm [shape: f32[24,64], index: 6, kind: input, shape index: {}]
  %s7 = inlined_call_operand.vmem [shape: f32[1,64], index: 7, kind: input, shape index: {}]
  %s8 = inlined_call_operand.hbm [shape: f32[2,64], index: 8, kind: output, shape index: {}]
  %s9 = sld [smem:[#allocation0]]
  $region58: #{tpu_custom_call.1} parent=0
    _
  %s11 = ssub.s32 1, %s9
  %s12 = scalar_select 0, %s11, %s9
  $region1: #{tpu_custom_call.1} parent=0
    #allocation2 [shape = 'u8[1024]{0}', space=vmem, size = 0x400, scoped, tag = 'input window, operand 0, single buffered']
    #allocation3 [shape = 's32[1]{0}', space=sflag, size = 0x4, scoped, tag = 'scoped memory for tpu_custom_call.1']
    #allocation4 [shape = 's32[1]{0}', space=sflag, size = 0x4, scoped, tag = 'scoped memory for tpu_custom_call.1']
    #allocation5 [shape = 'u8[8192]{0}', space=vmem, size = 0x2000, scoped, tag = 'input window, operand 2, single buffered']
    #allocation6 [shape = 's32[1]{0}', space=sflag, size = 0x4, scoped, tag = 'scoped memory for tpu_custom_call.1']
    #allocation7 [shape = 'u8[32768]{0}', space=vmem, size = 0x8000, scoped, tag = 'input window, operand 4, single buffered']
    #allocation8 [shape = 'u8[12288]{0}', space=vmem, size = 0x3000, scoped, tag = 'input window, operand 6, single buffered']
    #allocation9 [shape = 's32[1]{0}', space=sflag, size = 0x4, scoped, tag = 'scoped memory for tpu_custom_call.1']
    #allocation10 [shape = 'u8[1024]{0}', space=vmem, size = 0x400, scoped, tag = 'output window, operand 0, single buffered']
    %13 = vsyncpa [#allocation3], 0
    %14 = vsyncpa [#allocation6], 0
    %15 = vsyncpa [#allocation9], 0
    %16 = vsyncpa [#allocation4], 0
    // Predicated region
    $region2: #{tpu_custom_call.1} parent=1 // pred_check
      _
    $region3: #{tpu_custom_call.1} parent=1 // pred_check_branch
      %18 = sbr.rel (0) target = $region5
    $region4: #{tpu_custom_call.1} parent=1 // pred_region
      %s20 = ssub.s32 32, 32
      %21 = vsyncadd [#allocation3], %s20
      %s23 = sshll.u32 [#allocation2], 4
      %s24 = int_to_ptr.vmem [resolvable:$true] %s23
      %26 = dma.hbm_to_vmem [thread:$0]  %s0, 32, %s24, [#allocation3]
    $region5: #{tpu_custom_call.1} parent=1 // pred_fallthru
      _
    // Predicated region
    $region6: #{tpu_custom_call.1} parent=1 // pred_check
      _
    $region7: #{tpu_custom_call.1} parent=1 // pred_check_branch
      %28 = sbr.rel (0) target = $region9
    $region8: #{tpu_custom_call.1} parent=1 // pred_region
      _
    $region9: #{tpu_custom_call.1} parent=1 // pred_fallthru
      _
    // Predicated region
    $region10: #{tpu_custom_call.1} parent=1 // pred_check
      _
    $region11: #{tpu_custom_call.1} parent=1 // pred_check_branch
      %30 = sbr.rel (0) target = $region13
    $region12: #{tpu_custom_call.1} parent=1 // pred_region
      %s32 = ssub.s32 256, 256
      %33 = vsyncadd [#allocation6], %s32
      %s34 = sshll.u32 [#allocation5], 4
      %s35 = int_to_ptr.vmem [resolvable:$true] %s34
      %40 = dma.hbm_to_vmem [thread:$0]  %s2, 256, %s35, [#allocation6], 128, 128, 8
    $region13: #{tpu_custom_call.1} parent=1 // pred_fallthru
      _
    // Predicated region
    $region14: #{tpu_custom_call.1} parent=1 // pred_check
      _
    $region15: #{tpu_custom_call.1} parent=1 // pred_check_branch
      %42 = sbr.rel (0) target = $region17
    $region16: #{tpu_custom_call.1} parent=1 // pred_region
      _
    $region17: #{tpu_custom_call.1} parent=1 // pred_fallthru
      _
    // Predicated region
    $region18: #{tpu_custom_call.1} parent=1 // pred_check
      _
    $region19: #{tpu_custom_call.1} parent=1 // pred_check_branch
      %44 = sbr.rel (0) target = $region21
    $region20: #{tpu_custom_call.1} parent=1 // pred_region
      %s46 = ssub.s32 1024, 1024
      %47 = vsyncadd [#allocation6], %s46
      %s48 = sshll.u32 [#allocation7], 4
      %s49 = int_to_ptr.vmem [resolvable:$true] %s48
      %54 = dma.hbm_to_vmem [thread:$0]  %s4, 1024, %s49, [#allocation6], 128, 128, 8
    $region21: #{tpu_custom_call.1} parent=1 // pred_fallthru
      _
    // Predicated region
    $region22: #{tpu_custom_call.1} parent=1 // pred_check
      _
    $region23: #{tpu_custom_call.1} parent=1 // pred_check_branch
      %56 = sbr.rel (0) target = $region25
    $region24: #{tpu_custom_call.1} parent=1 // pred_region
      _
    $region25: #{tpu_custom_call.1} parent=1 // pred_fallthru
      _
    // Predicated region
    $region26: #{tpu_custom_call.1} parent=1 // pred_check
      _
    $region27: #{tpu_custom_call.1} parent=1 // pred_check_branch
      %58 = sbr.rel (0) target = $region29
    $region28: #{tpu_custom_call.1} parent=1 // pred_region
      %s60 = ssub.s32 384, 384
      %61 = vsyncadd [#allocation9], %s60
      %s62 = sshll.u32 [#allocation8], 4
      %s63 = int_to_ptr.vmem [resolvable:$true] %s62
      %68 = dma.hbm_to_vmem [thread:$0]  %s6, 384, %s63, [#allocation9], 128, 128, 8
    $region29: #{tpu_custom_call.1} parent=1 // pred_fallthru
      _
    // Predicated region
    $region30: #{tpu_custom_call.1} parent=1 // pred_check
      _
    $region31: #{tpu_custom_call.1} parent=1 // pred_check_branch
      %70 = sbr.rel (0) target = $region33
    $region32: #{tpu_custom_call.1} parent=1 // pred_region
      _
    $region33: #{tpu_custom_call.1} parent=1 // pred_fallthru
      _
    // Predicated region
    $region34: #{tpu_custom_call.1} parent=1 // pred_check
      _
    $region35: #{tpu_custom_call.1} parent=1 // pred_check_branch
      %72 = sbr.rel (0) target = $region37
    $region36: #{tpu_custom_call.1} parent=1 // pred_region
      %73 = dma.done [#allocation3], 32
    $region37: #{tpu_custom_call.1} parent=1 // pred_fallthru
      _
    // Predicated region
    $region38: #{tpu_custom_call.1} parent=1 // pred_check
      _
    $region39: #{tpu_custom_call.1} parent=1 // pred_check_branch
      %75 = sbr.rel (0) target = $region41
    $region40: #{tpu_custom_call.1} parent=1 // pred_region
      %76 = dma.done [#allocation6], 256
    $region41: #{tpu_custom_call.1} parent=1 // pred_fallthru
      _
    // Predicated region
    $region42: #{tpu_custom_call.1} parent=1 // pred_check
      _
    $region43: #{tpu_custom_call.1} parent=1 // pred_check_branch
      %78 = sbr.rel (0) target = $region45
    $region44: #{tpu_custom_call.1} parent=1 // pred_region
      %79 = dma.done [#allocation6], 1024
    $region45: #{tpu_custom_call.1} parent=1 // pred_fallthru
      _
    // Predicated region
    $region46: #{tpu_custom_call.1} parent=1 // pred_check
      _
    $region47: #{tpu_custom_call.1} parent=1 // pred_check_branch
      %81 = sbr.rel (0) target = $region49
    $region48: #{tpu_custom_call.1} parent=1 // pred_region
      %82 = dma.done [#allocation9], 384
    $region49: #{tpu_custom_call.1} parent=1 // pred_fallthru
      _
    %v83 = vld [vmem:[#allocation2] sm:$0x3]
    %v84 = vld [vmem:[#allocation5] sm:$0xff]
    %v85 = vld [vmem:[#allocation5 + $0x8] sm:$0xff]
    %v86 = vld [vmem:[%s3] sm:$0x1]
    %v88 = vlaneseq
    %v89 = vshrl.u32 %v88, 7
    %v90 = vsub.s32 0, %v89
    %v91 = vrot.slane %v86, %v90
    %vm93 = vcmask 130048
    %v95 = vsel %vm93, %v83, 0
    %97 = vmatprep.subr.mxu0 0.0
    %98 = vmatpush1.msra.mxu0 %v84
    %99 = vmatprep.subr.mxu0 0.0
    %100 = vmatpush1.msra.mxu0 %v85
    %101 = vmatprep.subr.mxu0 0.0
    %102 = vmatpush1.msra.mxu0 0.0
    %103 = vmatprep.subr.mxu0 0.0
    %104 = vmatpush1.msra.mxu0 0.0
    %105 = vmatprep.subr.mxu0 0.0
    %106 = vmatpush1.msra.mxu0 0.0
    %107 = vmatprep.subr.mxu0 0.0
    %108 = vmatpush1.msra.mxu0 0.0
    %109 = vmatprep.subr.mxu0 0.0
    %110 = vmatpush1.msra.mxu0 0.0
    %111 = vmatprep.subr.mxu0 0.0
    %112 = vmatpush1.msra.mxu0 0.0
    %113 = vmatprep.subr.mxu0 0.0
    %114 = vmatpush1.msra.mxu0 0.0
    %115 = vmatprep.subr.mxu0 0.0
    %116 = vmatpush1.msra.mxu0 0.0
    %117 = vmatprep.subr.mxu0 0.0
    %118 = vmatpush1.msra.mxu0 0.0
    %119 = vmatprep.subr.mxu0 0.0
    %120 = vmatpush1.msra.mxu0 0.0
    %121 = vmatprep.subr.mxu0 0.0
    %122 = vmatpush1.msra.mxu0 0.0
    %123 = vmatprep.subr.mxu0 0.0
    %124 = vmatpush1.msra.mxu0 0.0
    %125 = vmatprep.subr.mxu0 0.0
    %126 = vmatpush1.msra.mxu0 0.0
    %127 = vmatprep.subr.mxu0 0.0
    %128 = vmatpush1.msra.mxu0 0.0
    %129 = vmatprep.subr.mxu0 0.0
    %130 = vmatpush1.msra.mxu0 0.0
    %131 = vmatprep.subr.mxu0 0.0
    %132 = vmatpush1.msra.mxu0 0.0
    %133 = vmatprep.subr.mxu0 0.0
    %134 = vmatpush1.msra.mxu0 0.0
    %135 = vmatprep.subr.mxu0 0.0
    %136 = vmatpush1.msra.mxu0 0.0
    %137 = vmatprep.subr.mxu0 0.0
    %138 = vmatpush1.msra.mxu0 0.0
    %139 = vmatprep.subr.mxu0 0.0
    %140 = vmatpush1.msra.mxu0 0.0
    %141 = vmatprep.subr.mxu0 0.0
    %142 = vmatpush1.msra.mxu0 0.0
    %143 = vmatprep.subr.mxu0 0.0
    %144 = vmatpush1.msra.mxu0 0.0
    %145 = vmatprep.subr.mxu0 0.0
    %146 = vmatpush1.msra.mxu0 0.0
    %147 = vmatprep.subr.mxu0 0.0
    %148 = vmatpush1.msra.mxu0 0.0
    %149 = vmatprep.subr.mxu0 0.0
    %150 = vmatpush1.msra.mxu0 0.0
    %151 = vmatprep.subr.mxu0 0.0
    %152 = vmatpush1.msra.mxu0 0.0
    %153 = vmatprep.subr.mxu0 0.0
    %154 = vmatpush1.msra.mxu0 0.0
    %155 = vmatprep.subr.mxu0 0.0
    %156 = vmatpush1.msra.mxu0 0.0
    %157 = vmatprep.subr.mxu0 0.0
    %158 = vmatpush1.msra.mxu0 0.0
    %159 = vmatprep.subr.mxu0 0.0
    %160 = vmatpush1.msra.mxu0 0.0
    %161 = vmatprep.mubr.f32.mxu0 0.0
    %162 = vmatmul.mubr.f32.gmra.mrb[0].mxu0 %v95
    %v163 = vpop.f32.mrb[0].mxu0
    %v164 = vadd.f32 %v91, %v163
    %v165 = vpop.f32.mrb[0].mxu0
    %166 = vdwg.mxu0
    %v167 = vxor.u32 %v164, 2147483648
    %v168 = vmul.f32 %v167, 1.442695
    %v169 = vpow.pop %v168
    %v170 = vadd.f32 %v169, 1.0
    %v171 = vrcp.pop %v170
    %v172 = vmul.f32 1.0, %v171
    %v173 = vmul.f32 %v164, %v172
    %v174 = vld [vmem:[#allocation7] sm:$0xff]
    %v175 = vld [vmem:[#allocation7 + $0x8] sm:$0xff]
    %v176 = vld [vmem:[#allocation7 + $0x10] sm:$0xff]
    %v177 = vld [vmem:[#allocation7 + $0x18] sm:$0xff]
    %v178 = vld [vmem:[#allocation7 + $0x20] sm:$0xff]
    %v179 = vld [vmem:[#allocation7 + $0x28] sm:$0xff]
    %v180 = vld [vmem:[#allocation7 + $0x30] sm:$0xff]
    %v181 = vld [vmem:[#allocation7 + $0x38] sm:$0xff]
    %v182 = vld [vmem:[%s5] sm:$0x1]
    %v184 = vlaneseq
    %v185 = vshrl.u32 %v184, 7
    %v186 = vsub.s32 0, %v185
    %v187 = vrot.slane %v182, %v186
    %vm189 = vcmask 523264
    %v191 = vsel %vm189, %v173, 0
    %193 = vmatprep.subr.mxu0 0.0
    %194 = vmatpush1.msra.mxu0 %v174
    %195 = vmatprep.subr.mxu0 0.0
    %196 = vmatpush1.msra.mxu0 %v175
    %197 = vmatprep.subr.mxu0 0.0
    %198 = vmatpush1.msra.mxu0 %v176
    %199 = vmatprep.subr.mxu0 0.0
    %200 = vmatpush1.msra.mxu0 %v177
    %201 = vmatprep.subr.mxu0 0.0
    %202 = vmatpush1.msra.mxu0 %v178
    %203 = vmatprep.subr.mxu0 0.0
    %204 = vmatpush1.msra.mxu0 %v179
    %205 = vmatprep.subr.mxu0 0.0
    %206 = vmatpush1.msra.mxu0 %v180
    %207 = vmatprep.subr.mxu0 0.0
    %208 = vmatpush1.msra.mxu0 %v181
    %209 = vmatprep.subr.mxu0 0.0
    %210 = vmatpush1.msra.mxu0 0.0
    %211 = vmatprep.subr.mxu0 0.0
    %212 = vmatpush1.msra.mxu0 0.0
    %213 = vmatprep.subr.mxu0 0.0
    %214 = vmatpush1.msra.mxu0 0.0
    %215 = vmatprep.subr.mxu0 0.0
    %216 = vmatpush1.msra.mxu0 0.0
    %217 = vmatprep.subr.mxu0 0.0
    %218 = vmatpush1.msra.mxu0 0.0
    %219 = vmatprep.subr.mxu0 0.0
    %220 = vmatpush1.msra.mxu0 0.0
    %221 = vmatprep.subr.mxu0 0.0
    %222 = vmatpush1.msra.mxu0 0.0
    %223 = vmatprep.subr.mxu0 0.0
    %224 = vmatpush1.msra.mxu0 0.0
    %225 = vmatprep.subr.mxu0 0.0
    %226 = vmatpush1.msra.mxu0 0.0
    %227 = vmatprep.subr.mxu0 0.0
    %228 = vmatpush1.msra.mxu0 0.0
    %229 = vmatprep.subr.mxu0 0.0
    %230 = vmatpush1.msra.mxu0 0.0
    %231 = vmatprep.subr.mxu0 0.0
    %232 = vmatpush1.msra.mxu0 0.0
    %233 = vmatprep.subr.mxu0 0.0
    %234 = vmatpush1.msra.mxu0 0.0
    %235 = vmatprep.subr.mxu0 0.0
    %236 = vmatpush1.msra.mxu0 0.0
    %237 = vmatprep.subr.mxu0 0.0
    %238 = vmatpush1.msra.mxu0 0.0
    %239 = vmatprep.subr.mxu0 0.0
    %240 = vmatpush1.msra.mxu0 0.0
    %241 = vmatprep.subr.mxu0 0.0
    %242 = vmatpush1.msra.mxu0 0.0
    %243 = vmatprep.subr.mxu0 0.0
    %244 = vmatpush1.msra.mxu0 0.0
    %245 = vmatprep.subr.mxu0 0.0
    %246 = vmatpush1.msra.mxu0 0.0
    %247 = vmatprep.subr.mxu0 0.0
    %248 = vmatpush1.msra.mxu0 0.0
    %249 = vmatprep.subr.mxu0 0.0
    %250 = vmatpush1.msra.mxu0 0.0
    %251 = vmatprep.subr.mxu0 0.0
    %252 = vmatpush1.msra.mxu0 0.0
    %253 = vmatprep.subr.mxu0 0.0
    %254 = vmatpush1.msra.mxu0 0.0
    %255 = vmatprep.subr.mxu0 0.0
    %256 = vmatpush1.msra.mxu0 0.0
    %257 = vmatprep.mubr.f32.mxu0 0.0
    %258 = vmatmul.mubr.f32.gmra.mrb[0].mxu0 %v191
    %v259 = vpop.f32.mrb[0].mxu0
    %v260 = vadd.f32 %v187, %v259
    %v261 = vpop.f32.mrb[0].mxu0
    %262 = vdwg.mxu0
    %v263 = vld [vmem:[%s1] sm:$0x3]
    %v264 = vld [vmem:[#allocation8] sm:$0xff]
    %v265 = vld [vmem:[#allocation8 + $0x8] sm:$0xff]
    %v266 = vld [vmem:[#allocation8 + $0x10] sm:$0xff]
    %vm267 = vcmask 195584
    %v269 = vsel %vm267, %v263, 0
    %271 = vmatprep.subr.mxu0 0.0
    %272 = vmatpush1.msra.mxu0 %v264
    %273 = vmatprep.subr.mxu0 0.0
    %274 = vmatpush1.msra.mxu0 %v265
    %275 = vmatprep.subr.mxu0 0.0
    %276 = vmatpush1.msra.mxu0 %v266
    %277 = vmatprep.subr.mxu0 0.0
    %278 = vmatpush1.msra.mxu0 0.0
    %279 = vmatprep.subr.mxu0 0.0
    %280 = vmatpush1.msra.mxu0 0.0
    %281 = vmatprep.subr.mxu0 0.0
    %282 = vmatpush1.msra.mxu0 0.0
    %283 = vmatprep.subr.mxu0 0.0
    %284 = vmatpush1.msra.mxu0 0.0
    %285 = vmatprep.subr.mxu0 0.0
    %286 = vmatpush1.msra.mxu0 0.0
    %287 = vmatprep.subr.mxu0 0.0
    %288 = vmatpush1.msra.mxu0 0.0
    %289 = vmatprep.subr.mxu0 0.0
    %290 = vmatpush1.msra.mxu0 0.0
    %291 = vmatprep.subr.mxu0 0.0
    %292 = vmatpush1.msra.mxu0 0.0
    %293 = vmatprep.subr.mxu0 0.0
    %294 = vmatpush1.msra.mxu0 0.0
    %295 = vmatprep.subr.mxu0 0.0
    %296 = vmatpush1.msra.mxu0 0.0
    %297 = vmatprep.subr.mxu0 0.0
    %298 = vmatpush1.msra.mxu0 0.0
    %299 = vmatprep.subr.mxu0 0.0
    %300 = vmatpush1.msra.mxu0 0.0
    %301 = vmatprep.subr.mxu0 0.0
    %302 = vmatpush1.msra.mxu0 0.0
    %303 = vmatprep.subr.mxu0 0.0
    %304 = vmatpush1.msra.mxu0 0.0
    %305 = vmatprep.subr.mxu0 0.0
    %306 = vmatpush1.msra.mxu0 0.0
    %307 = vmatprep.subr.mxu0 0.0
    %308 = vmatpush1.msra.mxu0 0.0
    %309 = vmatprep.subr.mxu0 0.0
    %310 = vmatpush1.msra.mxu0 0.0
    %311 = vmatprep.subr.mxu0 0.0
    %312 = vmatpush1.msra.mxu0 0.0
    %313 = vmatprep.subr.mxu0 0.0
    %314 = vmatpush1.msra.mxu0 0.0
    %315 = vmatprep.subr.mxu0 0.0
    %316 = vmatpush1.msra.mxu0 0.0
    %317 = vmatprep.subr.mxu0 0.0
    %318 = vmatpush1.msra.mxu0 0.0
    %319 = vmatprep.subr.mxu0 0.0
    %320 = vmatpush1.msra.mxu0 0.0
    %321 = vmatprep.subr.mxu0 0.0
    %322 = vmatpush1.msra.mxu0 0.0
    %323 = vmatprep.subr.mxu0 0.0
    %324 = vmatpush1.msra.mxu0 0.0
    %325 = vmatprep.subr.mxu0 0.0
    %326 = vmatpush1.msra.mxu0 0.0
    %327 = vmatprep.subr.mxu0 0.0
    %328 = vmatpush1.msra.mxu0 0.0
    %329 = vmatprep.subr.mxu0 0.0
    %330 = vmatpush1.msra.mxu0 0.0
    %331 = vmatprep.subr.mxu0 0.0
    %332 = vmatpush1.msra.mxu0 0.0
    %333 = vmatprep.subr.mxu0 0.0
    %334 = vmatpush1.msra.mxu0 0.0
    %335 = vmatprep.mubr.f32.mxu0 0.0
    %336 = vmatmul.mubr.f32.gmra.mrb[0].mxu0 %v269
    %v337 = vpop.f32.mrb[0].mxu0
    %v338 = vadd.f32 0.0, %v337
    %v339 = vpop.f32.mrb[0].mxu0
    %340 = vdwg.mxu0
    %v341 = vadd.f32 %v260, %v338
    %v342 = vld [vmem:[%s7] sm:$0x1]
    %v344 = vlaneseq
    %v345 = vshrl.u32 %v344, 7
    %v346 = vsub.s32 0, %v345
    %v347 = vrot.slane %v342, %v346
    %v349 = vadd.f32 %v341, %v347
    %v350 = vxor.u32 %v349, 2147483648
    %v351 = vmul.f32 %v350, 1.442695
    %v352 = vpow.pop %v351
    %v353 = vadd.f32 %v352, 1.0
    %v354 = vrcp.pop %v353
    %v355 = vmul.f32 1.0, %v354
    %v356 = vmul.f32 %v349, %v355
    %vm357 = vcmask 517120
    %358 = vst.msk [vmem:[#allocation10] sm:$0x3] %vm357, %v356
    // Predicated region
    $region50: #{tpu_custom_call.1} parent=1 // pred_check
      _
    $region51: #{tpu_custom_call.1} parent=1 // pred_check_branch
      %360 = sbr.rel (0) target = $region53
    $region52: #{tpu_custom_call.1} parent=1 // pred_region
      %s362 = ssub.s32 32, 32
      %363 = vsyncadd [#allocation4], %s362
      %s365 = sshll.u32 [#allocation10], 4
      %s366 = int_to_ptr.vmem [resolvable:$true] %s365
      %368 = dma.vmem_to_hbm [thread:$0]  %s366, 32, %s8, [#allocation4]
    $region53: #{tpu_custom_call.1} parent=1 // pred_fallthru
      _
    // Predicated region
    $region54: #{tpu_custom_call.1} parent=1 // pred_check
      _
    $region55: #{tpu_custom_call.1} parent=1 // pred_check_branch
      %370 = sbr.rel (0) target = $region57
    $region56: #{tpu_custom_call.1} parent=1 // pred_region
      %371 = dma.done [#allocation4], 32
    $region57: #{tpu_custom_call.1} parent=1 // pred_fallthru
      _
    %372 = vsyncpa [#allocation3], 1
    %373 = vsyncpa [#allocation6], 1
    %374 = vsyncpa [#allocation9], 1
    %375 = vsyncpa [#allocation4], 1

</llo_original>
